<compile_context>
chip_gen: v7x
topology: tpu7x:2x2x1
jax: 0.10.0
libtpu: 0.0.40
codegen_flags: <defaults>
</compile_context>

<pallas_src>
import functools

import jax
import jax.numpy as jnp
import numpy as np
from jax.experimental import pallas as pl
from jax.experimental.pallas import tpu as pltpu  # noqa: F401  (TPU backend assumed)


# ----------------------------------------------------------------------------
# Fused kernel: span pooling + projections + label_net + one-hot + BCE loss.
# Single invocation (no grid); every array is a full-sized VMEM block.
# ----------------------------------------------------------------------------
def _srl_fused_kernel(enc_ref,                        # [B, T, H]  f32
                      span1_ref, span2_ref,           # [B, 2]     int32 (inclusive)
                      lab_ref,                        # [B, 1]     int32
                      wp1_ref, wp2_ref,               # [H, P]
                      w1_ref,                         # [2P, S]  (concat W1a;W1b)
                      lnb_ref,                        # [3, S]   (rows: b1, gamma, beta)
                      w2_ref, b2_ref,                 # [S, Lp], [1, Lp] (lane-padded)
                      pred_ref, onehot_ref, loss_ref, # [B, Lp], [B, Lp], [1, 1]
                      *, num_labels):
    x = enc_ref[...]                                  # [B, T, H]
    B, T, _ = x.shape
    P = wp1_ref.shape[1]

    # ---- inclusive span masks + counts (tiny int VPU work) ------------------
    s1 = span1_ref[...]
    s2 = span2_ref[...]
    t_idx = jax.lax.broadcasted_iota(jnp.int32, (B, T), 1)
    m1 = jnp.logical_and(t_idx >= s1[:, 0:1], t_idx <= s1[:, 1:2]).astype(jnp.float32)
    m2 = jnp.logical_and(t_idx >= s2[:, 0:1], t_idx <= s2[:, 1:2]).astype(jnp.float32)
    c1 = jnp.maximum(s1[:, 1:2] - s1[:, 0:1] + 1, 1).astype(jnp.float32)   # [B, 1]
    c2 = jnp.maximum(s2[:, 1:2] - s2[:, 0:1] + 1, 1).astype(jnp.float32)
    inv_c1 = pl.reciprocal(c1, approx=True)
    inv_c2 = pl.reciprocal(c2, approx=True)

    # ---- pool BEFORE projecting (projection is linear) ----------------------
    p1 = jnp.sum(x * m1[:, :, None], axis=1) * inv_c1                     # [B, H]
    p2 = jnp.sum(x * m2[:, :, None], axis=1) * inv_c2                     # [B, H]

    # ---- span projections (avg span module, use_proj=True) ------------------
    r1 = jnp.dot(p1, wp1_ref[...], preferred_element_type=jnp.float32)    # [B, P]
    r2 = jnp.dot(p2, wp2_ref[...], preferred_element_type=jnp.float32)    # [B, P]

    # ---- label_net: Linear(2P->S) on concat(r1, r2) == r1@W1[:P] + r2@W1[P:]
    lnb = lnb_ref[...]                                                    # [3, S]
    z = (jnp.dot(r1, w1_ref[pl.ds(0, P), :], preferred_element_type=jnp.float32)
         + jnp.dot(r2, w1_ref[pl.ds(P, P), :], preferred_element_type=jnp.float32)
         + lnb[0:1, :])
    t = jnp.tanh(z)

    # LayerNorm(S), eps = 1e-5 (PyTorch default), biased variance
    mu = jnp.mean(t, axis=-1, keepdims=True)
    var = jnp.mean((t - mu) ** 2, axis=-1, keepdims=True)
    t = (t - mu) * jax.lax.rsqrt(var + 1e-5)
    t = t * lnb[1:2, :] + lnb[2:3, :]

    # TODO(synk): nn.Dropout(0.2) is stochastic in training mode; identity here (eval).
    logits = jnp.dot(t, w2_ref[...], preferred_element_type=jnp.float32) + b2_ref[...]
    pred = jax.nn.sigmoid(logits)                                         # [B, Lp]
    pred_ref[...] = pred                                                  # lane-dense store

    # ---- fused one-hot (scatter_) + BCELoss over the first num_labels cols --
    Lp = pred.shape[1]
    cols = jax.lax.broadcasted_iota(jnp.int32, (B, Lp), 1)
    y = (cols == lab_ref[...]).astype(jnp.float32)                        # one-hot
    onehot_ref[...] = y
    valid = (cols < num_labels).astype(jnp.float32)                       # ignore padded lanes
    logp = jnp.maximum(jnp.log(pred), -100.0)                             # PyTorch BCE clamp
    log1mp = jnp.maximum(jnp.log(1.0 - pred), -100.0)
    per = -(y * logp + (1.0 - y) * log1mp) * valid
    loss_ref[...] = jnp.sum(per, keepdims=True) * (1.0 / (B * num_labels))


# ----------------------------------------------------------------------------
# Wrapper (eval-mode forward: returns (loss, pred_label, label))
# ----------------------------------------------------------------------------
@jax.jit
def srl_forward(encoded, span1, span2, label, params):
    B, T, H = encoded.shape
    S = params["w1a"].shape[1]
    L = params["w2"].shape[1]
    LANE = 128
    Lp = ((L + LANE - 1) // LANE) * LANE                  # pad label dim to full lanes

    # pack / pad weights in the wrapper (one-time XLA ops, fused under jit)
    w1 = jnp.concatenate([params["w1a"], params["w1b"]], axis=0)                     # [2P, S]
    lnb = jnp.concatenate([params["b1"], params["gamma"], params["beta"]], axis=0)   # [3, S]
    w2p = jnp.zeros((S, Lp), jnp.float32).at[:, :L].set(params["w2"])
    b2p = jnp.zeros((1, Lp), jnp.float32).at[:, :L].set(params["b2"])
    lab2d = label.reshape(B, 1).astype(jnp.int32)

    kernel = functools.partial(_srl_fused_kernel, num_labels=L)

    pred_p, onehot_p, loss = pl.pallas_call(
        kernel,
        out_shape=(jax.ShapeDtypeStruct((B, Lp), jnp.float32),
                   jax.ShapeDtypeStruct((B, Lp), jnp.float32),
                   jax.ShapeDtypeStruct((1, 1), jnp.float32)),
    )(encoded,
      span1.astype(jnp.int32), span2.astype(jnp.int32), lab2d,
      params["wp1"], params["wp2"], w1, lnb, w2p, b2p)

    return loss[0, 0], pred_p[:, :L], onehot_p[:, :L]


# ----------------------------------------------------------------------------
# Pure-JAX reference (for a correctness check)
# ----------------------------------------------------------------------------
def srl_reference(encoded, span1, span2, label, params):
    T = encoded.shape[1]

    def span_repr(wp, spans):
        h = jnp.einsum("bth,hp->btp", encoded, wp)
        t_idx = jnp.arange(T)
        m = ((t_idx[None, :] >= spans[:, 0:1]) &
             (t_idx[None, :] <= spans[:, 1:2])).astype(jnp.float32)
        return jnp.sum(h * m[:, :, None], axis=1) / jnp.sum(m, axis=1, keepdims=True)

    r1 = span_repr(params["wp1"], span1)
    r2 = span_repr(params["wp2"], span2)
    z = r1 @ params["w1a"] + r2 @ params["w1b"] + params["b1"]
    t = jnp.tanh(z)
    mu = jnp.mean(t, -1, keepdims=True)
    var = jnp.mean((t - mu) ** 2, -1, keepdims=True)
    t = (t - mu) / jnp.sqrt(var + 1e-5) * params["gamma"] + params["beta"]
    pred = jax.nn.sigmoid(t @ params["w2"] + params["b2"])
    L = pred.shape[1]
    y = jax.nn.one_hot(label, L, dtype=jnp.float32)
    loss = jnp.mean(-(y * jnp.log(pred) + (1.0 - y) * jnp.log(1.0 - pred)))
    return loss, pred, y


if __name__ == "__main__":
    B, T, H = 2, 16, 32          # batch, seq len, encoder hidden size
    P = S = 32                   # span_dim (projection dim == label_net hidden)
    L = 4                        # num_labels

    key = jax.random.PRNGKey(0)
    ks = jax.random.split(key, 10)
    encoded = jax.random.normal(ks[0], (B, T, H), jnp.float32)
    span1 = jnp.array([[1, 4], [0, 7]], jnp.int32)     # inclusive [start, end]
    span2 = jnp.array([[5, 9], [8, 15]], jnp.int32)
    label = jnp.array([2, 0], jnp.int32)

    params = {
        "wp1":   0.1 * jax.random.normal(ks[1], (H, P), jnp.float32),
        "wp2":   0.1 * jax.random.normal(ks[2], (H, P), jnp.float32),
        "w1a":   0.1 * jax.random.normal(ks[3], (P, S), jnp.float32),
        "w1b":   0.1 * jax.random.normal(ks[4], (P, S), jnp.float32),
        "b1":    0.01 * jax.random.normal(ks[5], (1, S), jnp.float32),
        "gamma": jnp.ones((1, S), jnp.float32),        # LayerNorm default init
        "beta":  jnp.zeros((1, S), jnp.float32),
        "w2":    0.1 * jax.random.normal(ks[6], (S, L), jnp.float32),
        "b2":    0.01 * jax.random.normal(ks[7], (1, L), jnp.float32),
    }

    loss, pred, lab = jax.block_until_ready(
        srl_forward(encoded, span1, span2, label, params))
    rloss, rpred, rlab = srl_reference(encoded, span1, span2, label, params)

    np.testing.assert_allclose(np.asarray(pred), np.asarray(rpred), rtol=2e-2, atol=2e-2)
    np.testing.assert_allclose(np.asarray(lab), np.asarray(rlab), rtol=0, atol=0)
    np.testing.assert_allclose(float(loss), float(rloss), rtol=2e-2, atol=2e-2)
    print("KERNEL_OK")
</pallas_src>

<mosaic_0001>
module attributes {stable_mosaic.version = 11 : i64} {
  func.func @_srl_fused_kernel(%arg0: memref<2x16x32xf32, #tpu.memory_space<vmem>>, %arg1: memref<2x2xi32, #tpu.memory_space<vmem>>, %arg2: memref<2x2xi32, #tpu.memory_space<vmem>>, %arg3: memref<2x1xi32, #tpu.memory_space<vmem>>, %arg4: memref<32x32xf32, #tpu.memory_space<vmem>>, %arg5: memref<32x32xf32, #tpu.memory_space<vmem>>, %arg6: memref<64x32xf32, #tpu.memory_space<vmem>>, %arg7: memref<3x32xf32, #tpu.memory_space<vmem>>, %arg8: memref<32x128xf32, #tpu.memory_space<vmem>>, %arg9: memref<1x128xf32, #tpu.memory_space<vmem>>, %arg10: memref<2x128xf32, #tpu.memory_space<vmem>>, %arg11: memref<2x128xf32, #tpu.memory_space<vmem>>, %arg12: memref<1x1xf32, #tpu.memory_space<vmem>>) attributes {dimension_semantics = [], scalar_prefetch = 0 : i64, scratch_operands = 0 : i64, tpu.core_type = #tpu.core_type<tc>} {
    %c0 = arith.constant 0 : index
    %c0_0 = arith.constant 0 : index
    %c0_1 = arith.constant 0 : index
    %0 = vector.load %arg0[%c0, %c0_0, %c0_1] : memref<2x16x32xf32, #tpu.memory_space<vmem>>, vector<2x16x32xf32>
    %c0_2 = arith.constant 0 : index
    %c0_3 = arith.constant 0 : index
    %1 = vector.load %arg1[%c0_2, %c0_3] : memref<2x2xi32, #tpu.memory_space<vmem>>, vector<2x2xi32>
    %c0_4 = arith.constant 0 : index
    %c0_5 = arith.constant 0 : index
    %2 = vector.load %arg2[%c0_4, %c0_5] : memref<2x2xi32, #tpu.memory_space<vmem>>, vector<2x2xi32>
    %3 = tpu.iota {dimensions = array<i32: 1>} : vector<2x16xi32>
    %4 = vector.extract_strided_slice %1 {offsets = [0, 0], sizes = [2, 1], strides = [1, 1]} : vector<2x2xi32> to vector<2x1xi32>
    %5 = vector.broadcast %4 : vector<2x1xi32> to vector<2x16xi32>
    %6 = arith.cmpi sge, %3, %5 : vector<2x16xi32>
    %7 = vector.extract_strided_slice %1 {offsets = [0, 1], sizes = [2, 1], strides = [1, 1]} : vector<2x2xi32> to vector<2x1xi32>
    %8 = vector.broadcast %7 : vector<2x1xi32> to vector<2x16xi32>
    %9 = arith.cmpi sle, %3, %8 : vector<2x16xi32>
    %10 = arith.andi %6, %9 : vector<2x16xi1>
    %11 = arith.extui %10 : vector<2x16xi1> to vector<2x16xi32>
    %12 = arith.sitofp %11 : vector<2x16xi32> to vector<2x16xf32>
    %13 = vector.extract_strided_slice %2 {offsets = [0, 0], sizes = [2, 1], strides = [1, 1]} : vector<2x2xi32> to vector<2x1xi32>
    %14 = vector.broadcast %13 : vector<2x1xi32> to vector<2x16xi32>
    %15 = arith.cmpi sge, %3, %14 : vector<2x16xi32>
    %16 = vector.extract_strided_slice %2 {offsets = [0, 1], sizes = [2, 1], strides = [1, 1]} : vector<2x2xi32> to vector<2x1xi32>
    %17 = vector.broadcast %16 : vector<2x1xi32> to vector<2x16xi32>
    %18 = arith.cmpi sle, %3, %17 : vector<2x16xi32>
    %19 = arith.andi %15, %18 : vector<2x16xi1>
    %20 = arith.extui %19 : vector<2x16xi1> to vector<2x16xi32>
    %21 = arith.sitofp %20 : vector<2x16xi32> to vector<2x16xf32>
    %22 = vector.extract_strided_slice %1 {offsets = [0, 1], sizes = [2, 1], strides = [1, 1]} : vector<2x2xi32> to vector<2x1xi32>
    %23 = vector.extract_strided_slice %1 {offsets = [0, 0], sizes = [2, 1], strides = [1, 1]} : vector<2x2xi32> to vector<2x1xi32>
    %24 = arith.subi %22, %23 : vector<2x1xi32>
    %c1_i32 = arith.constant 1 : i32
    %25 = vector.broadcast %c1_i32 : i32 to vector<2x1xi32>
    %26 = arith.addi %24, %25 : vector<2x1xi32>
    %c1_i32_6 = arith.constant 1 : i32
    %27 = vector.broadcast %c1_i32_6 : i32 to vector<2x1xi32>
    %28 = arith.maxsi %26, %27 : vector<2x1xi32>
    %29 = arith.sitofp %28 : vector<2x1xi32> to vector<2x1xf32>
    %30 = vector.extract_strided_slice %2 {offsets = [0, 1], sizes = [2, 1], strides = [1, 1]} : vector<2x2xi32> to vector<2x1xi32>
    %31 = vector.extract_strided_slice %2 {offsets = [0, 0], sizes = [2, 1], strides = [1, 1]} : vector<2x2xi32> to vector<2x1xi32>
    %32 = arith.subi %30, %31 : vector<2x1xi32>
    %c1_i32_7 = arith.constant 1 : i32
    %33 = vector.broadcast %c1_i32_7 : i32 to vector<2x1xi32>
    %34 = arith.addi %32, %33 : vector<2x1xi32>
    %c1_i32_8 = arith.constant 1 : i32
    %35 = vector.broadcast %c1_i32_8 : i32 to vector<2x1xi32>
    %36 = arith.maxsi %34, %35 : vector<2x1xi32>
    %37 = arith.sitofp %36 : vector<2x1xi32> to vector<2x1xf32>
    %38 = tpu.reciprocal %29 {approx = true} : vector<2x1xf32> -> vector<2x1xf32>
    %39 = tpu.reciprocal %37 {approx = true} : vector<2x1xf32> -> vector<2x1xf32>
    %40 = vector.shape_cast %12 : vector<2x16xf32> to vector<2x16x1xf32>
    %41 = vector.broadcast %40 : vector<2x16x1xf32> to vector<2x16x32xf32>
    %42 = arith.mulf %0, %41 : vector<2x16x32xf32>
    %cst = arith.constant dense<0.000000e+00> : vector<2x32xf32>
    %43 = vector.multi_reduction <add>, %42, %cst [1] : vector<2x16x32xf32> to vector<2x32xf32>
    %44 = vector.broadcast %38 : vector<2x1xf32> to vector<2x32xf32>
    %45 = arith.mulf %43, %44 : vector<2x32xf32>
    %46 = vector.shape_cast %21 : vector<2x16xf32> to vector<2x16x1xf32>
    %47 = vector.broadcast %46 : vector<2x16x1xf32> to vector<2x16x32xf32>
    %48 = arith.mulf %0, %47 : vector<2x16x32xf32>
    %cst_9 = arith.constant dense<0.000000e+00> : vector<2x32xf32>
    %49 = vector.multi_reduction <add>, %48, %cst_9 [1] : vector<2x16x32xf32> to vector<2x32xf32>
    %50 = vector.broadcast %39 : vector<2x1xf32> to vector<2x32xf32>
    %51 = arith.mulf %49, %50 : vector<2x32xf32>
    %c0_10 = arith.constant 0 : index
    %c0_11 = arith.constant 0 : index
    %52 = vector.load %arg4[%c0_10, %c0_11] : memref<32x32xf32, #tpu.memory_space<vmem>>, vector<32x32xf32>
    %cst_12 = arith.constant dense<0.000000e+00> : vector<2x32xf32>
    %53 = tpu.matmul %45, %52, %cst_12 {dimension_numbers = #tpu.dot_dimension_numbers<[1], [0], [0], [1], [0, 0, 1, 1], [], []>} : vector<2x32xf32>, vector<32x32xf32>, vector<2x32xf32> -> vector<2x32xf32>
    %c0_13 = arith.constant 0 : index
    %c0_14 = arith.constant 0 : index
    %54 = vector.load %arg5[%c0_13, %c0_14] : memref<32x32xf32, #tpu.memory_space<vmem>>, vector<32x32xf32>
    %cst_15 = arith.constant dense<0.000000e+00> : vector<2x32xf32>
    %55 = tpu.matmul %51, %54, %cst_15 {dimension_numbers = #tpu.dot_dimension_numbers<[1], [0], [0], [1], [0, 0, 1, 1], [], []>} : vector<2x32xf32>, vector<32x32xf32>, vector<2x32xf32> -> vector<2x32xf32>
    %c0_16 = arith.constant 0 : index
    %c0_17 = arith.constant 0 : index
    %56 = vector.load %arg7[%c0_16, %c0_17] : memref<3x32xf32, #tpu.memory_space<vmem>>, vector<3x32xf32>
    %c0_18 = arith.constant 0 : index
    %c0_19 = arith.constant 0 : index
    %57 = vector.load %arg6[%c0_18, %c0_19] : memref<64x32xf32, #tpu.memory_space<vmem>>, vector<32x32xf32>
    %cst_20 = arith.constant dense<0.000000e+00> : vector<2x32xf32>
    %58 = tpu.matmul %53, %57, %cst_20 {dimension_numbers = #tpu.dot_dimension_numbers<[1], [0], [0], [1], [0, 0, 1, 1], [], []>} : vector<2x32xf32>, vector<32x32xf32>, vector<2x32xf32> -> vector<2x32xf32>
    %c32 = arith.constant 32 : index
    %c0_21 = arith.constant 0 : index
    %59 = vector.load %arg6[%c32, %c0_21] : memref<64x32xf32, #tpu.memory_space<vmem>>, vector<32x32xf32>
    %cst_22 = arith.constant dense<0.000000e+00> : vector<2x32xf32>
    %60 = tpu.matmul %55, %59, %cst_22 {dimension_numbers = #tpu.dot_dimension_numbers<[1], [0], [0], [1], [0, 0, 1, 1], [], []>} : vector<2x32xf32>, vector<32x32xf32>, vector<2x32xf32> -> vector<2x32xf32>
    %61 = arith.addf %58, %60 : vector<2x32xf32>
    %62 = vector.extract_strided_slice %56 {offsets = [0, 0], sizes = [1, 32], strides = [1, 1]} : vector<3x32xf32> to vector<1x32xf32>
    %63 = vector.broadcast %62 : vector<1x32xf32> to vector<2x32xf32>
    %64 = arith.addf %61, %63 : vector<2x32xf32>
    %65 = math.tanh %64 : vector<2x32xf32>
    %cst_23 = arith.constant dense<0.000000e+00> : vector<2xf32>
    %66 = vector.multi_reduction <add>, %65, %cst_23 [1] : vector<2x32xf32> to vector<2xf32>
    %67 = vector.shape_cast %66 : vector<2xf32> to vector<2x1xf32>
    %cst_24 = arith.constant 3.200000e+01 : f32
    %68 = vector.broadcast %cst_24 : f32 to vector<2x1xf32>
    %69 = arith.divf %67, %68 : vector<2x1xf32>
    %70 = vector.broadcast %69 : vector<2x1xf32> to vector<2x32xf32>
    %71 = arith.subf %65, %70 : vector<2x32xf32>
    %72 = arith.mulf %71, %71 : vector<2x32xf32>
    %cst_25 = arith.constant dense<0.000000e+00> : vector<2xf32>
    %73 = vector.multi_reduction <add>, %72, %cst_25 [1] : vector<2x32xf32> to vector<2xf32>
    %74 = vector.shape_cast %73 : vector<2xf32> to vector<2x1xf32>
    %cst_26 = arith.constant 3.200000e+01 : f32
    %75 = vector.broadcast %cst_26 : f32 to vector<2x1xf32>
    %76 = arith.divf %74, %75 : vector<2x1xf32>
    %77 = vector.broadcast %69 : vector<2x1xf32> to vector<2x32xf32>
    %78 = arith.subf %65, %77 : vector<2x32xf32>
    %cst_27 = arith.constant 9.99999974E-6 : f32
    %79 = vector.broadcast %cst_27 : f32 to vector<2x1xf32>
    %80 = arith.addf %76, %79 : vector<2x1xf32>
    %81 = math.rsqrt %80 : vector<2x1xf32>
    %82 = vector.broadcast %81 : vector<2x1xf32> to vector<2x32xf32>
    %83 = arith.mulf %78, %82 : vector<2x32xf32>
    %84 = vector.extract_strided_slice %56 {offsets = [1, 0], sizes = [1, 32], strides = [1, 1]} : vector<3x32xf32> to vector<1x32xf32>
    %85 = vector.broadcast %84 : vector<1x32xf32> to vector<2x32xf32>
    %86 = arith.mulf %83, %85 : vector<2x32xf32>
    %87 = vector.extract_strided_slice %56 {offsets = [2, 0], sizes = [1, 32], strides = [1, 1]} : vector<3x32xf32> to vector<1x32xf32>
    %88 = vector.broadcast %87 : vector<1x32xf32> to vector<2x32xf32>
    %89 = arith.addf %86, %88 : vector<2x32xf32>
    %c0_28 = arith.constant 0 : index
    %c0_29 = arith.constant 0 : index
    %90 = vector.load %arg8[%c0_28, %c0_29] : memref<32x128xf32, #tpu.memory_space<vmem>>, vector<32x128xf32>
    %cst_30 = arith.constant dense<0.000000e+00> : vector<2x128xf32>
    %91 = tpu.matmul %89, %90, %cst_30 {dimension_numbers = #tpu.dot_dimension_numbers<[1], [0], [0], [1], [0, 0, 1, 1], [], []>} : vector<2x32xf32>, vector<32x128xf32>, vector<2x128xf32> -> vector<2x128xf32>
    %c0_31 = arith.constant 0 : index
    %c0_32 = arith.constant 0 : index
    %92 = vector.load %arg9[%c0_31, %c0_32] : memref<1x128xf32, #tpu.memory_space<vmem>>, vector<1x128xf32>
    %93 = vector.broadcast %92 : vector<1x128xf32> to vector<2x128xf32>
    %94 = arith.addf %91, %93 : vector<2x128xf32>
    %95 = arith.negf %94 : vector<2x128xf32>
    %96 = math.exp %95 : vector<2x128xf32>
    %cst_33 = arith.constant 1.000000e+00 : f32
    %97 = vector.broadcast %cst_33 : f32 to vector<2x128xf32>
    %98 = arith.addf %97, %96 : vector<2x128xf32>
    %99 = arith.divf %97, %98 : vector<2x128xf32>
    %c0_34 = arith.constant 0 : index
    %c0_35 = arith.constant 0 : index
    %100 = vector.load %arg10[%c0_34, %c0_35] : memref<2x128xf32, #tpu.memory_space<vmem>>, vector<2x128xf32>
    tpu.vector_store %arg10[%c0_34, %c0_35], %99 {strides = array<i32>} : memref<2x128xf32, #tpu.memory_space<vmem>>, vector<2x128xf32>,
    %101 = tpu.iota {dimensions = array<i32: 1>} : vector<2x128xi32>
    %c0_36 = arith.constant 0 : index
    %c0_37 = arith.constant 0 : index
    %102 = vector.load %arg3[%c0_36, %c0_37] : memref<2x1xi32, #tpu.memory_space<vmem>>, vector<2x1xi32>
    %103 = vector.broadcast %102 : vector<2x1xi32> to vector<2x128xi32>
    %104 = arith.cmpi eq, %101, %103 : vector<2x128xi32>
    %105 = arith.extui %104 : vector<2x128xi1> to vector<2x128xi32>
    %106 = arith.sitofp %105 : vector<2x128xi32> to vector<2x128xf32>
    %c0_38 = arith.constant 0 : index
    %c0_39 = arith.constant 0 : index
    %107 = vector.load %arg11[%c0_38, %c0_39] : memref<2x128xf32, #tpu.memory_space<vmem>>, vector<2x128xf32>
    tpu.vector_store %arg11[%c0_38, %c0_39], %106 {strides = array<i32>} : memref<2x128xf32, #tpu.memory_space<vmem>>, vector<2x128xf32>,
    %c4_i32 = arith.constant 4 : i32
    %108 = vector.broadcast %c4_i32 : i32 to vector<2x128xi32>
    %109 = arith.cmpi slt, %101, %108 : vector<2x128xi32>
    %110 = arith.extui %109 : vector<2x128xi1> to vector<2x128xi32>
    %111 = arith.sitofp %110 : vector<2x128xi32> to vector<2x128xf32>
    %112 = math.log %99 : vector<2x128xf32>
    %cst_40 = arith.constant -1.000000e+02 : f32
    %113 = vector.broadcast %cst_40 : f32 to vector<2x128xf32>
    %114 = arith.maximumf %112, %113 : vector<2x128xf32>
    %cst_41 = arith.constant 1.000000e+00 : f32
    %115 = vector.broadcast %cst_41 : f32 to vector<2x128xf32>
    %116 = arith.subf %115, %99 : vector<2x128xf32>
    %117 = math.log %116 : vector<2x128xf32>
    %cst_42 = arith.constant -1.000000e+02 : f32
    %118 = vector.broadcast %cst_42 : f32 to vector<2x128xf32>
    %119 = arith.maximumf %117, %118 : vector<2x128xf32>
    %120 = arith.mulf %106, %114 : vector<2x128xf32>
    %cst_43 = arith.constant 1.000000e+00 : f32
    %121 = vector.broadcast %cst_43 : f32 to vector<2x128xf32>
    %122 = arith.subf %121, %106 : vector<2x128xf32>
    %123 = arith.mulf %122, %119 : vector<2x128xf32>
    %124 = arith.addf %120, %123 : vector<2x128xf32>
    %cst_44 = arith.constant 0.000000e+00 : f32
    %125 = vector.broadcast %cst_44 : f32 to vector<2x128xf32>
    %126 = arith.subf %125, %124 : vector<2x128xf32>
    %127 = arith.mulf %126, %111 : vector<2x128xf32>
    %128 = vector.shape_cast %127 : vector<2x128xf32> to vector<1x2x128xf32>
    %cst_45 = arith.constant dense<0.000000e+00> : vector<1xf32>
    %129 = vector.multi_reduction <add>, %128, %cst_45 [1, 2] : vector<1x2x128xf32> to vector<1xf32>
    %130 = vector.shape_cast %129 : vector<1xf32> to vector<1x1x1xf32>
    %131 = vector.extract %130[0, 0, 0] : f32 from vector<1x1x1xf32>
    %132 = vector.broadcast %131 : f32 to vector<1x1xf32>
    %cst_46 = arith.constant 1.250000e-01 : f32
    %133 = vector.broadcast %cst_46 : f32 to vector<1x1xf32>
    %134 = arith.mulf %132, %133 : vector<1x1xf32>
    %c0_47 = arith.constant 0 : index
    %c0_48 = arith.constant 0 : index
    %135 = vector.load %arg12[%c0_47, %c0_48] : memref<1x1xf32, #tpu.memory_space<vmem>>, vector<1x1xf32>
    tpu.vector_store %arg12[%c0_47, %c0_48], %134 {strides = array<i32>} : memref<1x1xf32, #tpu.memory_space<vmem>>, vector<1x1xf32>,
    return
  }
}

</mosaic_0001>

<llo_original>
// kernel: srl_forward.1
$region0: #{srl_forward.1}
  #allocation0 [shape = 'u32[]', space=smem, size = 0x4, offset = 0x4, fixed_abs, tag = 'smem constant byte address 0x4 - core index']
  #allocation1 [shape = 'u32[144,128]{1,0:T(1,128)}', space=vmem, size = 0x12000, scoped, tag = 'internal scratch']
  %s0 = inlined_call_operand.vmem [shape: f32[2,16,32], index: 0, kind: input, shape index: {}]
  %s1 = inlined_call_operand.vmem [shape: s32[2,2], index: 1, kind: input, shape index: {}]
  %s2 = inlined_call_operand.vmem [shape: s32[2,2], index: 2, kind: input, shape index: {}]
  %s3 = inlined_call_operand.vmem [shape: s32[2,1], index: 3, kind: input, shape index: {}]
  %s4 = inlined_call_operand.vmem [shape: f32[32,32], index: 4, kind: input, shape index: {}]
  %s5 = inlined_call_operand.vmem [shape: f32[32,32], index: 5, kind: input, shape index: {}]
  %s6 = inlined_call_operand.vmem [shape: f32[64,32], index: 6, kind: input, shape index: {}]
  %s7 = inlined_call_operand.vmem [shape: f32[3,32], index: 7, kind: input, shape index: {}]
  %s8 = inlined_call_operand.vmem [shape: f32[32,128], index: 8, kind: input, shape index: {}]
  %s9 = inlined_call_operand.vmem [shape: f32[1,128], index: 9, kind: input, shape index: {}]
  %s10 = inlined_call_operand.hbm [shape: f32[2,128], index: 10, kind: output, shape index: {0}]
  %s11 = inlined_call_operand.hbm [shape: f32[2,128], index: 11, kind: output, shape index: {1}]
  %s12 = inlined_call_operand.hbm [shape: f32[1,1], index: 12, kind: output, shape index: {2}]
  %13 = xla_tuple %s10, %s11, %s12
  %s14 = sld [smem:[#allocation0]]
  $region66: #{srl_forward.1} parent=0
    _
  %s16 = ssub.s32 1, %s14
  %s17 = scalar_select 0, %s16, %s14
  $region1: #{srl_forward.1} parent=0
    #allocation2 [shape = 'u8[1024]{0}', space=vmem, size = 0x400, scoped, tag = 'output window, operand 0, single buffered']
    #allocation3 [shape = 's32[1]{0}', space=sflag, size = 0x4, scoped, tag = 'scoped memory for srl_forward.1']
    #allocation4 [shape = 'u8[1024]{0}', space=vmem, size = 0x400, scoped, tag = 'output window, operand 1, single buffered']
    #allocation5 [shape = 's32[1]{0}', space=sflag, size = 0x4, scoped, tag = 'scoped memory for srl_forward.1']
    #allocation6 [shape = 'u8[512]{0}', space=vmem, size = 0x400, scoped, tag = 'output window, operand 2, single buffered']
    %18 = vsyncpa [#allocation3], 0
    %19 = vsyncpa [#allocation5], 0
    // Predicated region
    $region2: #{srl_forward.1} parent=1 // pred_check
      _
    $region3: #{srl_forward.1} parent=1 // pred_check_branch
      %21 = sbr.rel (0) target = $region5
    $region4: #{srl_forward.1} parent=1 // pred_region
      _
    $region5: #{srl_forward.1} parent=1 // pred_fallthru
      _
    // Predicated region
    $region6: #{srl_forward.1} parent=1 // pred_check
      _
    $region7: #{srl_forward.1} parent=1 // pred_check_branch
      %23 = sbr.rel (0) target = $region9
    $region8: #{srl_forward.1} parent=1 // pred_region
      _
    $region9: #{srl_forward.1} parent=1 // pred_fallthru
      _
    // Predicated region
    $region10: #{srl_forward.1} parent=1 // pred_check
      _
    $region11: #{srl_forward.1} parent=1 // pred_check_branch
      %25 = sbr.rel (0) target = $region13
    $region12: #{srl_forward.1} parent=1 // pred_region
      _
    $region13: #{srl_forward.1} parent=1 // pred_fallthru
      _
    // Predicated region
    $region14: #{srl_forward.1} parent=1 // pred_check
      _
    $region15: #{srl_forward.1} parent=1 // pred_check_branch
      %27 = sbr.rel (0) target = $region17
    $region16: #{srl_forward.1} parent=1 // pred_region
      _
    $region17: #{srl_forward.1} parent=1 // pred_fallthru
      _
    // Predicated region
    $region18: #{srl_forward.1} parent=1 // pred_check
      _
    $region19: #{srl_forward.1} parent=1 // pred_check_branch
      %29 = sbr.rel (0) target = $region21
    $region20: #{srl_forward.1} parent=1 // pred_region
      _
    $region21: #{srl_forward.1} parent=1 // pred_fallthru
      _
    // Predicated region
    $region22: #{srl_forward.1} parent=1 // pred_check
      _
    $region23: #{srl_forward.1} parent=1 // pred_check_branch
      %31 = sbr.rel (0) target = $region25
    $region24: #{srl_forward.1} parent=1 // pred_region
      _
    $region25: #{srl_forward.1} parent=1 // pred_fallthru
      _
    // Predicated region
    $region26: #{srl_forward.1} parent=1 // pred_check
      _
    $region27: #{srl_forward.1} parent=1 // pred_check_branch
      %33 = sbr.rel (0) target = $region29
    $region28: #{srl_forward.1} parent=1 // pred_region
      _
    $region29: #{srl_forward.1} parent=1 // pred_fallthru
      _
    // Predicated region
    $region30: #{srl_forward.1} parent=1 // pred_check
      _
    $region31: #{srl_forward.1} parent=1 // pred_check_branch
      %35 = sbr.rel (0) target = $region33
    $region32: #{srl_forward.1} parent=1 // pred_region
      _
    $region33: #{srl_forward.1} parent=1 // pred_fallthru
      _
    // Predicated region
    $region34: #{srl_forward.1} parent=1 // pred_check
      _
    $region35: #{srl_forward.1} parent=1 // pred_check_branch
      %37 = sbr.rel (0) target = $region37
    $region36: #{srl_forward.1} parent=1 // pred_region
      _
    $region37: #{srl_forward.1} parent=1 // pred_fallthru
      _
    // Predicated region
    $region38: #{srl_forward.1} parent=1 // pred_check
      _
    $region39: #{srl_forward.1} parent=1 // pred_check_branch
      %39 = sbr.rel (0) target = $region41
    $region40: #{srl_forward.1} parent=1 // pred_region
      _
    $region41: #{srl_forward.1} parent=1 // pred_fallthru
      _
    %v40 = vld [vmem:[%s0] sm:$0xff]
    %v41 = vld [vmem:[%s0 + $0x8] sm:$0xff]
    %v42 = vld [vmem:[%s0 + $0x10] sm:$0xff]
    %v43 = vld [vmem:[%s0 + $0x18] sm:$0xff]
    %v44 = vld [vmem:[%s1] sm:$0x3]
    %v45 = vld [vmem:[%s2] sm:$0x3]
    %v46 = vlaneseq
    %v47 = vand.u32 %v46, 127
    %48 = vset.pattern.permute.xlu0 0
    %49 = vperm.xlu0 %48, %v44
    %v50 = vpop.permute.xlu0 %49
    %vm51 = vcmp.ge.s32.totalorder %v47, %v50
    %52 = vset.pattern.permute.xlu0 1
    %53 = vperm.xlu0 %52, %v44
    %v54 = vpop.permute.xlu0 %53
    %vm55 = vcmp.le.s32.totalorder %v47, %v54
    %vm56 = vmand %vm51, %vm55
    %v57 = vsel %vm56, 1, 0
    %v58 = vcvt.s32.f32 %v57
    %59 = vset.pattern.permute.xlu0 0
    %60 = vperm.xlu0 %59, %v45
    %v61 = vpop.permute.xlu0 %60
    %vm62 = vcmp.ge.s32.totalorder %v47, %v61
    %63 = vset.pattern.permute.xlu0 1
    %64 = vperm.xlu0 %63, %v45
    %v65 = vpop.permute.xlu0 %64
    %vm66 = vcmp.le.s32.totalorder %v47, %v65
    %vm67 = vmand %vm62, %vm66
    %v68 = vsel %vm67, 1, 0
    %v69 = vcvt.s32.f32 %v68
    %70 = vrot.lane.b32.xlu0 %v44, 1
    %v71 = vpop.permute.xlu0 %70
    %v72 = vsub.s32 %v44, %v71
    %v73 = vadd.s32 %v72, 1
    %vm74 = vcmp.gt.s32.totalorder %v73, 1
    %v75 = vsel %vm74, %v73, 1
    %v76 = vcvt.s32.f32 %v75
    %77 = vrot.lane.b32.xlu0 %v45, 1
    %v78 = vpop.permute.xlu0 %77
    %v79 = vsub.s32 %v45, %v78
    %v80 = vadd.s32 %v79, 1
    %vm81 = vcmp.gt.s32.totalorder %v80, 1
    %v82 = vsel %vm81, %v80, 1
    %v83 = vcvt.s32.f32 %v82
    %v84 = vrcp.pop %v76
    %v85 = vrcp.pop %v83
    %v86 = vlaneseq
    %v87 = vshrl.u32 %v86, 7
    %v88 = vsub.s32 0, %v87
    %v89 = vrot.slane %v58, %v88
    %91 = vbcast.lane.b32.xlu0 %v89, 256
    %v92 = vpop.permute.xlu0 %91
    %s94 = sor.u32 256, 8
    %95 = vbcast.lane.b32.xlu0 %v89, %s94
    %v96 = vpop.permute.xlu0 %95
    %v97 = vlaneseq
    %v98 = vshrl.u32 %v97, 7
    %v99 = vsub.s32 1, %v98
    %v100 = vrot.slane %v58, %v99
    %102 = vbcast.lane.b32.xlu0 %v100, 256
    %v103 = vpop.permute.xlu0 %102
    %s105 = sor.u32 256, 8
    %106 = vbcast.lane.b32.xlu0 %v100, %s105
    %v107 = vpop.permute.xlu0 %106
    %v108 = vmul.f32 %v40, %v92
    %v109 = vmul.f32 %v41, %v96
    %v110 = vmul.f32 %v42, %v103
    %v111 = vmul.f32 %v43, %v107
    %vm112 = vcmask 261120
    %v113 = vsel %vm112, %v108, 0.0
    %v114 = vsel %vm112, %v109, 0.0
    %v115 = vadd.f32 %v113, %v114
    %v116 = vrot.slane %v115, 4
    %v117 = vadd.f32 %v115, %v116
    %v118 = vrot.slane %v117, 2
    %v119 = vadd.f32 %v117, %v118
    %v120 = vrot.slane %v119, 1
    %v121 = vadd.f32 %v119, %v120
    %v122 = vsel %vm112, %v110, 0.0
    %v123 = vsel %vm112, %v111, 0.0
    %v124 = vadd.f32 %v122, %v123
    %v125 = vrot.slane %v124, 4
    %v126 = vadd.f32 %v124, %v125
    %v127 = vrot.slane %v126, 2
    %v128 = vadd.f32 %v126, %v127
    %v129 = vrot.slane %v128, 1
    %v130 = vadd.f32 %v128, %v129
    %132 = vset.pattern.permute.xlu0 1
    %133 = vperm.xlu0 %132, %v84
    %v134 = vpop.permute.xlu0 %133
    %v135 = vrot.slane %v134, 1
    %v138 = vmul.f32 %v121, %v134
    %v139 = vmul.f32 %v130, %v135
    %v140 = vlaneseq
    %v141 = vshrl.u32 %v140, 7
    %v142 = vsub.s32 0, %v141
    %v143 = vrot.slane %v69, %v142
    %145 = vbcast.lane.b32.xlu0 %v143, 256
    %v146 = vpop.permute.xlu0 %145
    %s148 = sor.u32 256, 8
    %149 = vbcast.lane.b32.xlu0 %v143, %s148
    %v150 = vpop.permute.xlu0 %149
    %v151 = vlaneseq
    %v152 = vshrl.u32 %v151, 7
    %v153 = vsub.s32 1, %v152
    %v154 = vrot.slane %v69, %v153
    %156 = vbcast.lane.b32.xlu0 %v154, 256
    %v157 = vpop.permute.xlu0 %156
    %s159 = sor.u32 256, 8
    %160 = vbcast.lane.b32.xlu0 %v154, %s159
    %v161 = vpop.permute.xlu0 %160
    %v162 = vmul.f32 %v40, %v146
    %v163 = vmul.f32 %v41, %v150
    %v164 = vmul.f32 %v42, %v157
    %v165 = vmul.f32 %v43, %v161
    %v166 = vsel %vm112, %v162, 0.0
    %v167 = vsel %vm112, %v163, 0.0
    %v168 = vadd.f32 %v166, %v167
    %v169 = vrot.slane %v168, 4
    %v170 = vadd.f32 %v168, %v169
    %v171 = vrot.slane %v170, 2
    %v172 = vadd.f32 %v170, %v171
    %v173 = vrot.slane %v172, 1
    %v174 = vadd.f32 %v172, %v173
    %v175 = vsel %vm112, %v164, 0.0
    %v176 = vsel %vm112, %v165, 0.0
    %v177 = vadd.f32 %v175, %v176
    %v178 = vrot.slane %v177, 4
    %v179 = vadd.f32 %v177, %v178
    %v180 = vrot.slane %v179, 2
    %v181 = vadd.f32 %v179, %v180
    %v182 = vrot.slane %v181, 1
    %v183 = vadd.f32 %v181, %v182
    %185 = vset.pattern.permute.xlu0 1
    %186 = vperm.xlu0 %185, %v85
    %v187 = vpop.permute.xlu0 %186
    %v188 = vrot.slane %v187, 1
    %v191 = vmul.f32 %v174, %v187
    %v192 = vmul.f32 %v183, %v188
    %v193 = vld [vmem:[%s4] sm:$0xff]
    %v194 = vld [vmem:[%s4 + $0x8] sm:$0xff]
    %v195 = vld [vmem:[%s4 + $0x10] sm:$0xff]
    %v196 = vld [vmem:[%s4 + $0x18] sm:$0xff]
    %v199 = vrot.slane %v139, 7
    %vm200 = vcmask 1041409
    %v201 = vsel %vm200, %v199, %v138
    %v202 = vsel %vm112, %v201, 0
    %204 = vmatprep.subr.mxu0 0.0
    %205 = vmatpush1.msra.mxu0 %v193
    %206 = vmatprep.subr.mxu0 0.0
    %207 = vmatpush1.msra.mxu0 %v194
    %208 = vmatprep.subr.mxu0 0.0
    %209 = vmatpush1.msra.mxu0 %v195
    %210 = vmatprep.subr.mxu0 0.0
    %211 = vmatpush1.msra.mxu0 %v196
    %212 = vmatprep.subr.mxu0 0.0
    %213 = vmatpush1.msra.mxu0 0.0
    %214 = vmatprep.subr.mxu0 0.0
    %215 = vmatpush1.msra.mxu0 0.0
    %216 = vmatprep.subr.mxu0 0.0
    %217 = vmatpush1.msra.mxu0 0.0
    %218 = vmatprep.subr.mxu0 0.0
    %219 = vmatpush1.msra.mxu0 0.0
    %220 = vmatprep.subr.mxu0 0.0
    %221 = vmatpush1.msra.mxu0 0.0
    %222 = vmatprep.subr.mxu0 0.0
    %223 = vmatpush1.msra.mxu0 0.0
    %224 = vmatprep.subr.mxu0 0.0
    %225 = vmatpush1.msra.mxu0 0.0
    %226 = vmatprep.subr.mxu0 0.0
    %227 = vmatpush1.msra.mxu0 0.0
    %228 = vmatprep.subr.mxu0 0.0
    %229 = vmatpush1.msra.mxu0 0.0
    %230 = vmatprep.subr.mxu0 0.0
    %231 = vmatpush1.msra.mxu0 0.0
    %232 = vmatprep.subr.mxu0 0.0
    %233 = vmatpush1.msra.mxu0 0.0
    %234 = vmatprep.subr.mxu0 0.0
    %235 = vmatpush1.msra.mxu0 0.0
    %236 = vmatprep.subr.mxu0 0.0
    %237 = vmatpush1.msra.mxu0 0.0
    %238 = vmatprep.subr.mxu0 0.0
    %239 = vmatpush1.msra.mxu0 0.0
    %240 = vmatprep.subr.mxu0 0.0
    %241 = vmatpush1.msra.mxu0 0.0
    %242 = vmatprep.subr.mxu0 0.0
    %243 = vmatpush1.msra.mxu0 0.0
    %244 = vmatprep.subr.mxu0 0.0
    %245 = vmatpush1.msra.mxu0 0.0
    %246 = vmatprep.subr.mxu0 0.0
    %247 = vmatpush1.msra.mxu0 0.0
    %248 = vmatprep.subr.mxu0 0.0
    %249 = vmatpush1.msra.mxu0 0.0
    %250 = vmatprep.subr.mxu0 0.0
    %251 = vmatpush1.msra.mxu0 0.0
    %252 = vmatprep.subr.mxu0 0.0
    %253 = vmatpush1.msra.mxu0 0.0
    %254 = vmatprep.subr.mxu0 0.0
    %255 = vmatpush1.msra.mxu0 0.0
    %256 = vmatprep.subr.mxu0 0.0
    %257 = vmatpush1.msra.mxu0 0.0
    %258 = vmatprep.subr.mxu0 0.0
    %259 = vmatpush1.msra.mxu0 0.0
    %260 = vmatprep.subr.mxu0 0.0
    %261 = vmatpush1.msra.mxu0 0.0
    %262 = vmatprep.subr.mxu0 0.0
    %263 = vmatpush1.msra.mxu0 0.0
    %264 = vmatprep.subr.mxu0 0.0
    %265 = vmatpush1.msra.mxu0 0.0
    %266 = vmatprep.subr.mxu0 0.0
    %267 = vmatpush1.msra.mxu0 0.0
    %268 = vmatprep.mubr.f32.mxu0 0.0
    %269 = vmatmul.mubr.f32.gmra.mrb[0].mxu0 %v202
    %v270 = vpop.f32.mrb[0].mxu0
    %v271 = vadd.f32 0.0, %v270
    %v272 = vpop.f32.mrb[0].mxu0
    %273 = vdwg.mxu0
    %v274 = vld [vmem:[%s5] sm:$0xff]
    %v275 = vld [vmem:[%s5 + $0x8] sm:$0xff]
    %v276 = vld [vmem:[%s5 + $0x10] sm:$0xff]
    %v277 = vld [vmem:[%s5 + $0x18] sm:$0xff]
    %v280 = vrot.slane %v192, 7
    %v281 = vsel %vm200, %v280, %v191
    %v282 = vsel %vm112, %v281, 0
    %284 = vmatprep.subr.mxu0 0.0
    %285 = vmatpush1.msra.mxu0 %v274
    %286 = vmatprep.subr.mxu0 0.0
    %287 = vmatpush1.msra.mxu0 %v275
    %288 = vmatprep.subr.mxu0 0.0
    %289 = vmatpush1.msra.mxu0 %v276
    %290 = vmatprep.subr.mxu0 0.0
    %291 = vmatpush1.msra.mxu0 %v277
    %292 = vmatprep.subr.mxu0 0.0
    %293 = vmatpush1.msra.mxu0 0.0
    %294 = vmatprep.subr.mxu0 0.0
    %295 = vmatpush1.msra.mxu0 0.0
    %296 = vmatprep.subr.mxu0 0.0
    %297 = vmatpush1.msra.mxu0 0.0
    %298 = vmatprep.subr.mxu0 0.0
    %299 = vmatpush1.msra.mxu0 0.0
    %300 = vmatprep.subr.mxu0 0.0
    %301 = vmatpush1.msra.mxu0 0.0
    %302 = vmatprep.subr.mxu0 0.0
    %303 = vmatpush1.msra.mxu0 0.0
    %304 = vmatprep.subr.mxu0 0.0
    %305 = vmatpush1.msra.mxu0 0.0
    %306 = vmatprep.subr.mxu0 0.0
    %307 = vmatpush1.msra.mxu0 0.0
    %308 = vmatprep.subr.mxu0 0.0
    %309 = vmatpush1.msra.mxu0 0.0
    %310 = vmatprep.subr.mxu0 0.0
    %311 = vmatpush1.msra.mxu0 0.0
    %312 = vmatprep.subr.mxu0 0.0
    %313 = vmatpush1.msra.mxu0 0.0
    %314 = vmatprep.subr.mxu0 0.0
    %315 = vmatpush1.msra.mxu0 0.0
    %316 = vmatprep.subr.mxu0 0.0
    %317 = vmatpush1.msra.mxu0 0.0
    %318 = vmatprep.subr.mxu0 0.0
    %319 = vmatpush1.msra.mxu0 0.0
    %320 = vmatprep.subr.mxu0 0.0
    %321 = vmatpush1.msra.mxu0 0.0
    %322 = vmatprep.subr.mxu0 0.0
    %323 = vmatpush1.msra.mxu0 0.0
    %324 = vmatprep.subr.mxu0 0.0
    %325 = vmatpush1.msra.mxu0 0.0
    %326 = vmatprep.subr.mxu0 0.0
    %327 = vmatpush1.msra.mxu0 0.0
    %328 = vmatprep.subr.mxu0 0.0
    %329 = vmatpush1.msra.mxu0 0.0
    %330 = vmatprep.subr.mxu0 0.0
    %331 = vmatpush1.msra.mxu0 0.0
    %332 = vmatprep.subr.mxu0 0.0
    %333 = vmatpush1.msra.mxu0 0.0
    %334 = vmatprep.subr.mxu0 0.0
    %335 = vmatpush1.msra.mxu0 0.0
    %336 = vmatprep.subr.mxu0 0.0
    %337 = vmatpush1.msra.mxu0 0.0
    %338 = vmatprep.subr.mxu0 0.0
    %339 = vmatpush1.msra.mxu0 0.0
    %340 = vmatprep.subr.mxu0 0.0
    %341 = vmatpush1.msra.mxu0 0.0
    %342 = vmatprep.subr.mxu0 0.0
    %343 = vmatpush1.msra.mxu0 0.0
    %344 = vmatprep.subr.mxu0 0.0
    %345 = vmatpush1.msra.mxu0 0.0
    %346 = vmatprep.subr.mxu0 0.0
    %347 = vmatpush1.msra.mxu0 0.0
    %348 = vmatprep.mubr.f32.mxu0 0.0
    %349 = vmatmul.mubr.f32.gmra.mrb[0].mxu0 %v282
    %v350 = vpop.f32.mrb[0].mxu0
    %v351 = vadd.f32 0.0, %v350
    %v352 = vpop.f32.mrb[0].mxu0
    %353 = vdwg.mxu0
    %v354 = vld [vmem:[%s7] sm:$0x7]
    %v355 = vld [vmem:[%s6] sm:$0xff]
    %v356 = vld [vmem:[%s6 + $0x8] sm:$0xff]
    %v357 = vld [vmem:[%s6 + $0x10] sm:$0xff]
    %v358 = vld [vmem:[%s6 + $0x18] sm:$0xff]
    %v359 = vld [vmem:[%s6 + $0x20] sm:$0xff]
    %v360 = vld [vmem:[%s6 + $0x28] sm:$0xff]
    %v361 = vld [vmem:[%s6 + $0x30] sm:$0xff]
    %v362 = vld [vmem:[%s6 + $0x38] sm:$0xff]
    %v364 = vsel %vm112, %v351, 0
    %366 = vmatprep.subr.mxu0 0.0
    %367 = vmatpush1.msra.mxu0 %v359
    %368 = vmatprep.subr.mxu0 0.0
    %369 = vmatpush1.msra.mxu0 %v360
    %370 = vmatprep.subr.mxu0 0.0
    %371 = vmatpush1.msra.mxu0 %v361
    %372 = vmatprep.subr.mxu0 0.0
    %373 = vmatpush1.msra.mxu0 %v362
    %374 = vmatprep.subr.mxu0 0.0
    %375 = vmatpush1.msra.mxu0 0.0
    %376 = vmatprep.subr.mxu0 0.0
    %377 = vmatpush1.msra.mxu0 0.0
    %378 = vmatprep.subr.mxu0 0.0
    %379 = vmatpush1.msra.mxu0 0.0
    %380 = vmatprep.subr.mxu0 0.0
    %381 = vmatpush1.msra.mxu0 0.0
    %382 = vmatprep.subr.mxu0 0.0
    %383 = vmatpush1.msra.mxu0 0.0
    %384 = vmatprep.subr.mxu0 0.0
    %385 = vmatpush1.msra.mxu0 0.0
    %386 = vmatprep.subr.mxu0 0.0
    %387 = vmatpush1.msra.mxu0 0.0
    %388 = vmatprep.subr.mxu0 0.0
    %389 = vmatpush1.msra.mxu0 0.0
    %390 = vmatprep.subr.mxu0 0.0
    %391 = vmatpush1.msra.mxu0 0.0
    %392 = vmatprep.subr.mxu0 0.0
    %393 = vmatpush1.msra.mxu0 0.0
    %394 = vmatprep.subr.mxu0 0.0
    %395 = vmatpush1.msra.mxu0 0.0
    %396 = vmatprep.subr.mxu0 0.0
    %397 = vmatpush1.msra.mxu0 0.0
    %398 = vmatprep.subr.mxu0 0.0
    %399 = vmatpush1.msra.mxu0 0.0
    %400 = vmatprep.subr.mxu0 0.0
    %401 = vmatpush1.msra.mxu0 0.0
    %402 = vmatprep.subr.mxu0 0.0
    %403 = vmatpush1.msra.mxu0 0.0
    %404 = vmatprep.subr.mxu0 0.0
    %405 = vmatpush1.msra.mxu0 0.0
    %406 = vmatprep.subr.mxu0 0.0
    %407 = vmatpush1.msra.mxu0 0.0
    %408 = vmatprep.subr.mxu0 0.0
    %409 = vmatpush1.msra.mxu0 0.0
    %410 = vmatprep.subr.mxu0 0.0
    %411 = vmatpush1.msra.mxu0 0.0
    %412 = vmatprep.subr.mxu0 0.0
    %413 = vmatpush1.msra.mxu0 0.0
    %414 = vmatprep.subr.mxu0 0.0
    %415 = vmatpush1.msra.mxu0 0.0
    %416 = vmatprep.subr.mxu0 0.0
    %417 = vmatpush1.msra.mxu0 0.0
    %418 = vmatprep.subr.mxu0 0.0
    %419 = vmatpush1.msra.mxu0 0.0
    %420 = vmatprep.subr.mxu0 0.0
    %421 = vmatpush1.msra.mxu0 0.0
    %422 = vmatprep.subr.mxu0 0.0
    %423 = vmatpush1.msra.mxu0 0.0
    %424 = vmatprep.subr.mxu0 0.0
    %425 = vmatpush1.msra.mxu0 0.0
    %426 = vmatprep.subr.mxu0 0.0
    %427 = vmatpush1.msra.mxu0 0.0
    %428 = vmatprep.subr.mxu0 0.0
    %429 = vmatpush1.msra.mxu0 0.0
    %430 = vmatprep.mubr.f32.mxu0 0.0
    %431 = vmatmul.mubr.f32.gmra.mrb[0].mxu0 %v364
    %v432 = vpop.f32.mrb[0].mxu0
    %v433 = vadd.f32 0.0, %v432
    %v434 = vpop.f32.mrb[0].mxu0
    %435 = vdwg.mxu0
    %v437 = vsel %vm112, %v271, 0
    %439 = vmatprep.subr.mxu0 0.0
    %440 = vmatpush1.msra.mxu0 %v355
    %441 = vmatprep.subr.mxu0 0.0
    %442 = vmatpush1.msra.mxu0 %v356
    %443 = vmatprep.subr.mxu0 0.0
    %444 = vmatpush1.msra.mxu0 %v357
    %445 = vmatprep.subr.mxu0 0.0
    %446 = vmatpush1.msra.mxu0 %v358
    %447 = vmatprep.subr.mxu0 0.0
    %448 = vmatpush1.msra.mxu0 0.0
    %449 = vmatprep.subr.mxu0 0.0
    %450 = vmatpush1.msra.mxu0 0.0
    %451 = vmatprep.subr.mxu0 0.0
    %452 = vmatpush1.msra.mxu0 0.0
    %453 = vmatprep.subr.mxu0 0.0
    %454 = vmatpush1.msra.mxu0 0.0
    %455 = vmatprep.subr.mxu0 0.0
    %456 = vmatpush1.msra.mxu0 0.0
    %457 = vmatprep.subr.mxu0 0.0
    %458 = vmatpush1.msra.mxu0 0.0
    %459 = vmatprep.subr.mxu0 0.0
    %460 = vmatpush1.msra.mxu0 0.0
    %461 = vmatprep.subr.mxu0 0.0
    %462 = vmatpush1.msra.mxu0 0.0
    %463 = vmatprep.subr.mxu0 0.0
    %464 = vmatpush1.msra.mxu0 0.0
    %465 = vmatprep.subr.mxu0 0.0
    %466 = vmatpush1.msra.mxu0 0.0
    %467 = vmatprep.subr.mxu0 0.0
    %468 = vmatpush1.msra.mxu0 0.0
    %469 = vmatprep.subr.mxu0 0.0
    %470 = vmatpush1.msra.mxu0 0.0
    %471 = vmatprep.subr.mxu0 0.0
    %472 = vmatpush1.msra.mxu0 0.0
    %473 = vmatprep.subr.mxu0 0.0
    %474 = vmatpush1.msra.mxu0 0.0
    %475 = vmatprep.subr.mxu0 0.0
    %476 = vmatpush1.msra.mxu0 0.0
    %477 = vmatprep.subr.mxu0 0.0
    %478 = vmatpush1.msra.mxu0 0.0
    %479 = vmatprep.subr.mxu0 0.0
    %480 = vmatpush1.msra.mxu0 0.0
    %481 = vmatprep.subr.mxu0 0.0
    %482 = vmatpush1.msra.mxu0 0.0
    %483 = vmatprep.subr.mxu0 0.0
    %484 = vmatpush1.msra.mxu0 0.0
    %485 = vmatprep.subr.mxu0 0.0
    %486 = vmatpush1.msra.mxu0 0.0
    %487 = vmatprep.subr.mxu0 0.0
    %488 = vmatpush1.msra.mxu0 0.0
    %489 = vmatprep.subr.mxu0 0.0
    %490 = vmatpush1.msra.mxu0 0.0
    %491 = vmatprep.subr.mxu0 0.0
    %492 = vmatpush1.msra.mxu0 0.0
    %493 = vmatprep.subr.mxu0 0.0
    %494 = vmatpush1.msra.mxu0 0.0
    %495 = vmatprep.subr.mxu0 0.0
    %496 = vmatpush1.msra.mxu0 0.0
    %497 = vmatprep.subr.mxu0 0.0
    %498 = vmatpush1.msra.mxu0 0.0
    %499 = vmatprep.subr.mxu0 0.0
    %500 = vmatpush1.msra.mxu0 0.0
    %501 = vmatprep.subr.mxu0 0.0
    %502 = vmatpush1.msra.mxu0 0.0
    %503 = vmatprep.mubr.f32.mxu0 0.0
    %504 = vmatmul.mubr.f32.gmra.mrb[0].mxu0 %v437
    %v505 = vpop.f32.mrb[0].mxu0
    %v506 = vadd.f32 %v433, %v505
    %v507 = vpop.f32.mrb[0].mxu0
    %508 = vdwg.mxu0
    %v509 = vlaneseq
    %v510 = vshrl.u32 %v509, 7
    %v511 = vsub.s32 0, %v510
    %v512 = vrot.slane %v354, %v511
    %v513 = vadd.f32 %v506, %v512
    %v514 = vtanh.pop %v513
    %vm515 = vcmask 254976
    %v516 = vsel %vm515, %v514, 0.0
    %517 = vadd.xlane.f32.xlu0 %v516
    %v518 = vpop.xlane.xlu0 %517
    %v519 = vrcp.pop 32.0
    %v520 = vmul.f32 %v518, %v519
    %v521 = vsub.f32 %v514, %v520
    %v522 = vmul.f32 %v521, %v521
    %v523 = vsel %vm515, %v522, 0.0
    %524 = vadd.xlane.f32.xlu0 %v523
    %v525 = vpop.xlane.xlu0 %524
    %v526 = vmul.f32 %v525, %v519
    %v527 = vadd.f32 %v526, 1e-05
    %v528 = vrsqrt.pop %v527
    %v529 = vmul.f32 %v521, %v528
    %v530 = vlaneseq
    %v531 = vshrl.u32 %v530, 7
    %v532 = vsub.s32 1, %v531
    %v533 = vrot.slane %v354, %v532
    %v534 = vmul.f32 %v529, %v533
    %v535 = vlaneseq
    %v536 = vshrl.u32 %v535, 7
    %v537 = vsub.s32 2, %v536
    %v538 = vrot.slane %v354, %v537
    %v539 = vadd.f32 %v534, %v538
    %v540 = vld [vmem:[%s8] sm:$0xff]
    %v541 = vld [vmem:[%s8 + $0x8] sm:$0xff]
    %v542 = vld [vmem:[%s8 + $0x10] sm:$0xff]
    %v543 = vld [vmem:[%s8 + $0x18] sm:$0xff]
    %v544 = vld [vmem:[%s9] sm:$0x1]
    %v546 = vlaneseq
    %v547 = vshrl.u32 %v546, 7
    %v548 = vsub.s32 0, %v547
    %v549 = vrot.slane %v544, %v548
    %v552 = vsel %vm112, %v539, 0
    %554 = vmatprep.subr.mxu0 0.0
    %555 = vmatpush1.msra.mxu0 %v540
    %556 = vmatprep.subr.mxu0 0.0
    %557 = vmatpush1.msra.mxu0 %v541
    %558 = vmatprep.subr.mxu0 0.0
    %559 = vmatpush1.msra.mxu0 %v542
    %560 = vmatprep.subr.mxu0 0.0
    %561 = vmatpush1.msra.mxu0 %v543
    %562 = vmatprep.subr.mxu0 0.0
    %563 = vmatpush1.msra.mxu0 0.0
    %564 = vmatprep.subr.mxu0 0.0
    %565 = vmatpush1.msra.mxu0 0.0
    %566 = vmatprep.subr.mxu0 0.0
    %567 = vmatpush1.msra.mxu0 0.0
    %568 = vmatprep.subr.mxu0 0.0
    %569 = vmatpush1.msra.mxu0 0.0
    %570 = vmatprep.subr.mxu0 0.0
    %571 = vmatpush1.msra.mxu0 0.0
    %572 = vmatprep.subr.mxu0 0.0
    %573 = vmatpush1.msra.mxu0 0.0
    %574 = vmatprep.subr.mxu0 0.0
    %575 = vmatpush1.msra.mxu0 0.0
    %576 = vmatprep.subr.mxu0 0.0
    %577 = vmatpush1.msra.mxu0 0.0
    %578 = vmatprep.subr.mxu0 0.0
    %579 = vmatpush1.msra.mxu0 0.0
    %580 = vmatprep.subr.mxu0 0.0
    %581 = vmatpush1.msra.mxu0 0.0
    %582 = vmatprep.subr.mxu0 0.0
    %583 = vmatpush1.msra.mxu0 0.0
    %584 = vmatprep.subr.mxu0 0.0
    %585 = vmatpush1.msra.mxu0 0.0
    %586 = vmatprep.subr.mxu0 0.0
    %587 = vmatpush1.msra.mxu0 0.0
    %588 = vmatprep.subr.mxu0 0.0
    %589 = vmatpush1.msra.mxu0 0.0
    %590 = vmatprep.subr.mxu0 0.0
    %591 = vmatpush1.msra.mxu0 0.0
    %592 = vmatprep.subr.mxu0 0.0
    %593 = vmatpush1.msra.mxu0 0.0
    %594 = vmatprep.subr.mxu0 0.0
    %595 = vmatpush1.msra.mxu0 0.0
    %596 = vmatprep.subr.mxu0 0.0
    %597 = vmatpush1.msra.mxu0 0.0
    %598 = vmatprep.subr.mxu0 0.0
    %599 = vmatpush1.msra.mxu0 0.0
    %600 = vmatprep.subr.mxu0 0.0
    %601 = vmatpush1.msra.mxu0 0.0
    %602 = vmatprep.subr.mxu0 0.0
    %603 = vmatpush1.msra.mxu0 0.0
    %604 = vmatprep.subr.mxu0 0.0
    %605 = vmatpush1.msra.mxu0 0.0
    %606 = vmatprep.subr.mxu0 0.0
    %607 = vmatpush1.msra.mxu0 0.0
    %608 = vmatprep.subr.mxu0 0.0
    %609 = vmatpush1.msra.mxu0 0.0
    %610 = vmatprep.subr.mxu0 0.0
    %611 = vmatpush1.msra.mxu0 0.0
    %612 = vmatprep.subr.mxu0 0.0
    %613 = vmatpush1.msra.mxu0 0.0
    %614 = vmatprep.subr.mxu0 0.0
    %615 = vmatpush1.msra.mxu0 0.0
    %616 = vmatprep.subr.mxu0 0.0
    %617 = vmatpush1.msra.mxu0 0.0
    %618 = vmatprep.mubr.f32.mxu0 0.0
    %619 = vmatmul.mubr.f32.gmra.mrb[0].mxu0 %v552
    %v620 = vpop.f32.mrb[0].mxu0
    %v621 = vadd.f32 %v549, %v620
    %v622 = vpop.f32.mrb[0].mxu0
    %623 = vdwg.mxu0
    %v624 = vxor.u32 %v621, 2147483648
    %v625 = vmul.f32 %v624, 1.442695
    %v626 = vpow.pop %v625
    %v627 = vadd.f32 %v626, 1.0
    %v628 = vrcp.pop %v627
    %v629 = vmul.f32 1.0, %v628
    %630 = vst [vmem:[#allocation2] sm:$0x3] %v629
    %v631 = vld [vmem:[%s3] sm:$0x3]
    %632 = vset.pattern.permute.xlu0 0
    %633 = vperm.xlu0 %632, %v631
    %v634 = vpop.permute.xlu0 %633
    %vm635 = vcmp.eq.s32.totalorder %v47, %v634
    %v636 = vsel %vm635, 1, 0
    %v637 = vcvt.s32.f32 %v636
    %638 = vst [vmem:[#allocation4] sm:$0x3] %v637
    %vm639 = vcmp.lt.s32.totalorder %v47, 4
    %v640 = vsel %vm639, 1, 0
    %v641 = vcvt.s32.f32 %v640
    %v642 = vlog2.pop %v629
    %v643 = vmul.f32 %v642, 0.6931472
    %v644 = vmax.f32 %v643, -100.0
    %v645 = vsub.f32 1.0, %v629
    %v646 = vlog2.pop %v645
    %v647 = vmul.f32 %v646, 0.6931472
    %v648 = vmax.f32 %v647, -100.0
    %v649 = vmul.f32 %v637, %v644
    %v650 = vsub.f32 1.0, %v637
    %v651 = vmul.f32 %v650, %v648
    %v652 = vadd.f32 %v649, %v651
    %v653 = vsub.f32 0.0, %v652
    %v654 = vmul.f32 %v653, %v641
    %vm655 = vcmask 1041408
    %v656 = vsel %vm655, %v654, 0.0
    %657 = vadd.xlane.f32.xlu0 %v656
    %v658 = vpop.xlane.xlu0 %657
    %v659 = vrot.slane %v658, 4
    %v660 = vadd.f32 %v658, %v659
    %v661 = vrot.slane %v660, 2
    %v662 = vadd.f32 %v660, %v661
    %v663 = vrot.slane %v662, 1
    %v664 = vadd.f32 %v662, %v663
    %s665 = vtos %v664
    %v666 = vstv %s665
    %v667 = vmul.f32 %v666, 0.125
    %vm668 = vcmask 0
    %669 = vst.msk [vmem:[#allocation6] sm:$0x1] %vm668, %v667
    // Predicated region
    $region42: #{srl_forward.1} parent=1 // pred_check
      _
    $region43: #{srl_forward.1} parent=1 // pred_check_branch
      %671 = sbr.rel (0) target = $region45
    $region44: #{srl_forward.1} parent=1 // pred_region
      %s673 = ssub.s32 32, 32
      %674 = vsyncadd [#allocation3], %s673
      %s676 = sshll.u32 [#allocation2], 4
      %s677 = int_to_ptr.vmem [resolvable:$true] %s676
      %679 = dma.vmem_to_hbm [thread:$0]  %s677, 32, %s10, [#allocation3]
    $region45: #{srl_forward.1} parent=1 // pred_fallthru
      _
    // Predicated region
    $region46: #{srl_forward.1} parent=1 // pred_check
      _
    $region47: #{srl_forward.1} parent=1 // pred_check_branch
      %681 = sbr.rel (0) target = $region49
    $region48: #{srl_forward.1} parent=1 // pred_region
      %s683 = ssub.s32 32, 32
      %684 = vsyncadd [#allocation5], %s683
      %s686 = sshll.u32 [#allocation4], 4
      %s687 = int_to_ptr.vmem [resolvable:$true] %s686
      %689 = dma.vmem_to_hbm [thread:$0]  %s687, 32, %s11, [#allocation5]
    $region49: #{srl_forward.1} parent=1 // pred_fallthru
      _
    // Predicated region
    $region50: #{srl_forward.1} parent=1 // pred_check
      _
    $region51: #{srl_forward.1} parent=1 // pred_check_branch
      %691 = sbr.rel (0) target = $region53
    $region52: #{srl_forward.1} parent=1 // pred_region
      %s693 = ssub.s32 16, 16
      %694 = vsyncadd [#allocation5], %s693
      %s696 = sshll.u32 [#allocation6], 4
      %s697 = int_to_ptr.vmem [resolvable:$true] %s696
      %699 = dma.vmem_to_hbm [thread:$0]  %s697, 16, %s12, [#allocation5]
    $region53: #{srl_forward.1} parent=1 // pred_fallthru
      _
    // Predicated region
    $region54: #{srl_forward.1} parent=1 // pred_check
      _
    $region55: #{srl_forward.1} parent=1 // pred_check_branch
      %701 = sbr.rel (0) target = $region57
    $region56: #{srl_forward.1} parent=1 // pred_region
      %702 = dma.done [#allocation3], 32
    $region57: #{srl_forward.1} parent=1 // pred_fallthru
      _
    // Predicated region
    $region58: #{srl_forward.1} parent=1 // pred_check
      _
    $region59: #{srl_forward.1} parent=1 // pred_check_branch
      %704 = sbr.rel (0) target = $region61
    $region60: #{srl_forward.1} parent=1 // pred_region
      %705 = dma.done [#allocation5], 32
    $region61: #{srl_forward.1} parent=1 // pred_fallthru
      _
    // Predicated region
    $region62: #{srl_forward.1} parent=1 // pred_check
      _
    $region63: #{srl_forward.1} parent=1 // pred_check_branch
      %707 = sbr.rel (0) target = $region65
    $region64: #{srl_forward.1} parent=1 // pred_region
      %708 = dma.done [#allocation5], 16
    $region65: #{srl_forward.1} parent=1 // pred_fallthru
      _
    %709 = vsyncpa [#allocation3], 1
    %710 = vsyncpa [#allocation5], 1

</llo_original>
